<compile_context>
chip_gen: v6e
topology: v6e:2x2x1
jax: 0.10.0
libtpu: 0.0.40
codegen_flags: <defaults>
</compile_context>

<pallas_src>
import functools

import numpy as np
import jax
import jax.numpy as jnp
from jax import lax
from jax.experimental import pallas as pl
from jax.experimental.pallas import tpu as pltpu


# ---------------------------------------------------------------------------
# Kernel
# ---------------------------------------------------------------------------

def _im2row_fill(slab_ref, act, n, H_in, H_out, K, stride, padding, WC):
    """Scatter the K kh-taps of one sample's activation into the im2row slab.

    slab_ref : (N*H_out, K*WC) f32 scratch, pre-zeroed (zero rows = row padding)
    act      : (H_in, WC) f32 value (already ReLU'd / BN-applied)
    Row n*H_out + h, columns [kh*WC, (kh+1)*WC) hold act[stride*h + kh - padding].
    """
    for kh in range(K):
        h_lo = max(0, -((kh - padding) // stride))                  # ceil((p-kh)/stride)
        h_hi = min(H_out - 1, (H_in - 1 + padding - kh) // stride)
        if h_hi < h_lo:
            continue
        num = h_hi - h_lo + 1
        src0 = stride * h_lo + kh - padding
        if stride == 1:
            src = act[src0:src0 + num, :]
        else:
            src = lax.slice(act, (src0, 0),
                            (src0 + stride * (num - 1) + 1, WC), (stride, 1))
        slab_ref[n * H_out + h_lo:n * H_out + h_lo + num,
                 kh * WC:(kh + 1) * WC] = src


def _sepconv_kernel(x_ref, m1_ref, m2_ref, r1_ref, r2_ref,
                    g1_ref, b1_ref, g2_ref, b2_ref,
                    out_ref, slab1_ref, slab2_ref,
                    *, N, K, stride, padding, H, H1, H2,
                    inv_cnt1, inv_cnt2, eps):
    WC = x_ref.shape[-1]            # W  * C_in
    W1C = m1_ref.shape[-1]          # W1 * C_in

    # ---- stage 1: ReLU -> im2row slab (kh taps folded into the contraction) --
    slab1_ref[...] = jnp.zeros_like(slab1_ref)
    for n in range(N):
        act = jnp.maximum(x_ref[n], 0.0)                           # (H, WC) f32
        _im2row_fill(slab1_ref, act, n, H, H1, K, stride, padding, WC)

    # ---- fused depthwise+pointwise conv #1: ONE MXU matmul --------------------
    y1 = jnp.dot(slab1_ref[...].astype(jnp.bfloat16), m1_ref[...],
                 preferred_element_type=jnp.float32)               # (N*H1, W1C)

    # ---- BatchNorm1 (train-mode batch stats, two-pass centered) + ReLU --------
    mean1 = jnp.dot(jnp.sum(y1, axis=0, keepdims=True), r1_ref[...],
                    preferred_element_type=jnp.float32) * inv_cnt1
    d1 = y1 - mean1
    var1 = jnp.dot(jnp.sum(d1 * d1, axis=0, keepdims=True), r1_ref[...],
                   preferred_element_type=jnp.float32) * inv_cnt1
    scale1 = g1_ref[...] * lax.rsqrt(var1 + eps)
    z = jnp.maximum(d1 * scale1 + b1_ref[...], 0.0)                # (N*H1, W1C)

    # ---- stage 2: im2row slab (second depthwise conv is always stride 1) ------
    slab2_ref[...] = jnp.zeros_like(slab2_ref)
    for n in range(N):
        _im2row_fill(slab2_ref, z[n * H1:(n + 1) * H1, :], n,
                     H1, H2, K, 1, padding, W1C)

    # ---- fused depthwise+pointwise conv #2: ONE MXU matmul --------------------
    y2 = jnp.dot(slab2_ref[...].astype(jnp.bfloat16), m2_ref[...],
                 preferred_element_type=jnp.float32)               # (N*H2, W2C)

    # ---- BatchNorm2 ------------------------------------------------------------
    mean2 = jnp.dot(jnp.sum(y2, axis=0, keepdims=True), r2_ref[...],
                    preferred_element_type=jnp.float32) * inv_cnt2
    d2 = y2 - mean2
    var2 = jnp.dot(jnp.sum(d2 * d2, axis=0, keepdims=True), r2_ref[...],
                   preferred_element_type=jnp.float32) * inv_cnt2
    scale2 = g2_ref[...] * lax.rsqrt(var2 + eps)
    out_ref[...] = d2 * scale2 + b2_ref[...]                       # (N*H2, W2C) full-width store


# ---------------------------------------------------------------------------
# Plain-JAX glue: weight standardization + banded combined-weight construction
# ---------------------------------------------------------------------------

def _standardize_ws(w):
    """Weight standardization of the custom Conv2d (PyTorch OIHW weights)."""
    mean = jnp.mean(w, axis=(1, 2, 3), keepdims=True)
    wc = w - mean
    std = jnp.std(wc.reshape(w.shape[0], -1), axis=1, ddof=1).reshape(-1, 1, 1, 1) + 1e-5
    return wc / std


def _banded_weight(w_dw, w_pw_std, W_in, W_out, K, stride, padding):
    """Combined depthwise*pointwise weight with kh folded into the contraction.

    Returns (K*W_in*C_in, W_out*C_out) bf16 with
      M[kh*W_in*C_in + wi*C_in + c, w*C_out + co]
        = sum_{kw : stride*w + kw - padding == wi} w_dw[c,0,kh,kw] * w_pw_std[co,c]
    (kw taps, width zero-padding and the width stride are all folded in).
    """
    C_in = w_dw.shape[0]
    C_out = w_pw_std.shape[0]
    wd = jnp.transpose(w_dw[:, 0], (1, 2, 0))                  # (K, K, C_in)
    wc = jnp.einsum('hwc,oc->hwco', wd, w_pw_std)              # (K, K, C_in, C_out)
    blocks = []
    for kh in range(K):
        m = jnp.zeros((W_in * C_in, W_out * C_out), jnp.float32)
        for kw in range(K):
            P = np.zeros((W_in, W_out), np.float32)
            for w in range(W_out):
                wi = stride * w + kw - padding
                if 0 <= wi < W_in:
                    P[wi, w] = 1.0
            m = m + jnp.kron(jnp.asarray(P), wc[kh, kw])
        blocks.append(m)
    return jnp.concatenate(blocks, axis=0).astype(jnp.bfloat16)


def _reduce_bcast_matrix(Wn, C):
    """(Wn*C, Wn*C) 0/1 matrix: out[j] = sum_i in[i] over lanes with i%C == j%C.
    One matmul both reduces over w and broadcasts the per-channel result back."""
    idx = np.arange(Wn * C)
    return jnp.asarray((idx[:, None] % C) == (idx[None, :] % C), dtype=jnp.float32)


def init_sepconv_params(key, C_in, C_out, kernel_size):
    k1, k2, k3, k4, k5, k6, k7, k8 = jax.random.split(key, 8)
    return dict(
        w_dw1=0.3 * jax.random.normal(k1, (C_in, 1, kernel_size, kernel_size), jnp.float32),
        w_pw1=0.3 * jax.random.normal(k2, (C_in, C_in, 1, 1), jnp.float32),
        gamma1=1.0 + 0.1 * jax.random.normal(k5, (C_in,), jnp.float32),
        beta1=0.1 * jax.random.normal(k6, (C_in,), jnp.float32),
        w_dw2=0.3 * jax.random.normal(k3, (C_in, 1, kernel_size, kernel_size), jnp.float32),
        w_pw2=0.3 * jax.random.normal(k4, (C_out, C_in, 1, 1), jnp.float32),
        gamma2=1.0 + 0.1 * jax.random.normal(k7, (C_out,), jnp.float32),
        beta2=0.1 * jax.random.normal(k8, (C_out,), jnp.float32),
    )


# ---------------------------------------------------------------------------
# Forward
# ---------------------------------------------------------------------------

def sepconv_forward(x_nchw, params, *, kernel_size, stride, padding):
    N, C_in, H, W = x_nchw.shape
    C_out = params["w_pw2"].shape[0]
    K = kernel_size
    H1 = (H + 2 * padding - K) // stride + 1
    W1 = (W + 2 * padding - K) // stride + 1
    H2 = H1 + 2 * padding - K + 1
    W2 = W1 + 2 * padding - K + 1
    eps = 1e-5

    # NCHW -> lane-dense (N, H, W*C_in)
    x = jnp.transpose(x_nchw, (0, 2, 3, 1)).astype(jnp.float32).reshape(N, H, W * C_in)

    # Weight standardization (1x1 convs only) + banded combined conv weights.
    wp1 = _standardize_ws(params["w_pw1"])[:, :, 0, 0]          # (C_in, C_in)   [co, c]
    wp2 = _standardize_ws(params["w_pw2"])[:, :, 0, 0]          # (C_out, C_in)
    m1 = _banded_weight(params["w_dw1"], wp1, W, W1, K, stride, padding)   # (K*W*C_in,  W1*C_in)
    m2 = _banded_weight(params["w_dw2"], wp2, W1, W2, K, 1, padding)       # (K*W1*C_in, W2*C_out)

    # Constant per-channel reduce+broadcast matrices for the in-kernel BatchNorms.
    r1 = _reduce_bcast_matrix(W1, C_in)                          # (W1*C_in,  W1*C_in)
    r2 = _reduce_bcast_matrix(W2, C_out)                         # (W2*C_out, W2*C_out)

    # BN affine params tiled to the (w*C + c) lane layout.
    g1 = jnp.tile(params["gamma1"], W1).reshape(1, W1 * C_in).astype(jnp.float32)
    b1 = jnp.tile(params["beta1"], W1).reshape(1, W1 * C_in).astype(jnp.float32)
    g2 = jnp.tile(params["gamma2"], W2).reshape(1, W2 * C_out).astype(jnp.float32)
    b2 = jnp.tile(params["beta2"], W2).reshape(1, W2 * C_out).astype(jnp.float32)

    kern = functools.partial(
        _sepconv_kernel, N=N, K=K, stride=stride, padding=padding,
        H=H, H1=H1, H2=H2,
        inv_cnt1=1.0 / (N * H1 * W1), inv_cnt2=1.0 / (N * H2 * W2), eps=eps)

    flops = (2 * (N * H1) * (K * W * C_in) * (W1 * C_in)
             + 2 * (N * H2) * (K * W1 * C_in) * (W2 * C_out)
             + 4 * (W1 * C_in) ** 2 + 4 * (W2 * C_out) ** 2)
    bytes_accessed = (x.size * 4 + m1.size * 2 + m2.size * 2
                      + r1.size * 4 + r2.size * 4
                      + (g1.size + b1.size + g2.size + b2.size) * 4
                      + N * H2 * W2 * C_out * 4)

    out_flat = pl.pallas_call(
        kern,
        grid=(1,),
        in_specs=[
            pl.BlockSpec((N, H, W * C_in), lambda i: (0, 0, 0)),
            pl.BlockSpec((K * W * C_in, W1 * C_in), lambda i: (0, 0)),
            pl.BlockSpec((K * W1 * C_in, W2 * C_out), lambda i: (0, 0)),
            pl.BlockSpec((W1 * C_in, W1 * C_in), lambda i: (0, 0)),
            pl.BlockSpec((W2 * C_out, W2 * C_out), lambda i: (0, 0)),
            pl.BlockSpec((1, W1 * C_in), lambda i: (0, 0)),
            pl.BlockSpec((1, W1 * C_in), lambda i: (0, 0)),
            pl.BlockSpec((1, W2 * C_out), lambda i: (0, 0)),
            pl.BlockSpec((1, W2 * C_out), lambda i: (0, 0)),
        ],
        out_specs=pl.BlockSpec((N * H2, W2 * C_out), lambda i: (0, 0)),
        out_shape=jax.ShapeDtypeStruct((N * H2, W2 * C_out), jnp.float32),
        scratch_shapes=[
            pltpu.VMEM((N * H1, K * W * C_in), jnp.float32),     # im2row slab, stage 1
            pltpu.VMEM((N * H2, K * W1 * C_in), jnp.float32),    # im2row slab, stage 2
        ],
        compiler_params=pltpu.CompilerParams(
            dimension_semantics=("arbitrary",),
            vmem_limit_bytes=32 * 1024 * 1024),
        cost_estimate=pl.CostEstimate(
            flops=flops,
            transcendentals=W1 * C_in + W2 * C_out,
            bytes_accessed=bytes_accessed),
    )(x, m1, m2, r1, r2, g1, b1, g2, b2)

    # lane-dense (N*H2, W2*C_out) -> NCHW (XLA fuses this with downstream consumers)
    return jnp.transpose(out_flat.reshape(N, H2, W2, C_out), (0, 3, 1, 2))


# ---------------------------------------------------------------------------
# Pure-JAX NCHW reference (f32, HIGHEST precision) for validation
# ---------------------------------------------------------------------------

def sepconv_reference(x, params, *, kernel_size, stride, padding):
    C_in = x.shape[1]

    def conv(h, w, s, p, groups):
        return lax.conv_general_dilated(
            h, w, (s, s), [(p, p), (p, p)],
            dimension_numbers=("NCHW", "OIHW", "NCHW"),
            feature_group_count=groups, precision=lax.Precision.HIGHEST)

    def bn(h, g, b, eps=1e-5):
        m = jnp.mean(h, axis=(0, 2, 3), keepdims=True)
        v = jnp.mean((h - m) ** 2, axis=(0, 2, 3), keepdims=True)
        return (h - m) / jnp.sqrt(v + eps) * g.reshape(1, -1, 1, 1) + b.reshape(1, -1, 1, 1)

    h = jnp.maximum(x, 0.0)
    h = conv(h, params["w_dw1"], stride, padding, C_in)
    h = conv(h, _standardize_ws(params["w_pw1"]), 1, 0, 1)
    h = bn(h, params["gamma1"], params["beta1"])
    h = jnp.maximum(h, 0.0)
    h = conv(h, params["w_dw2"], 1, padding, C_in)
    h = conv(h, _standardize_ws(params["w_pw2"]), 1, 0, 1)
    h = bn(h, params["gamma2"], params["beta2"])
    return h


if __name__ == "__main__":
    N, C_in, C_out, H, W = 2, 4, 8, 16, 16
    kernel_size, stride, padding = 3, 1, 1

    key = jax.random.PRNGKey(0)
    kx, kp = jax.random.split(key)
    x = jax.random.normal(kx, (N, C_in, H, W), jnp.float32)
    params = init_sepconv_params(kp, C_in, C_out, kernel_size)

    out = sepconv_forward(x, params, kernel_size=kernel_size, stride=stride, padding=padding)
    out = jax.block_until_ready(out)

    ref = sepconv_reference(x, params, kernel_size=kernel_size, stride=stride, padding=padding)
    # Tolerance accounts for bf16 MXU operands (f32 accumulation) vs f32 reference.
    np.testing.assert_allclose(np.asarray(out), np.asarray(ref), rtol=3e-2, atol=3e-2)

    print("KERNEL_OK")
</pallas_src>

<mosaic_0001>
module attributes {stable_mosaic.version = 11 : i64} {
  func.func @_sepconv_kernel(%arg0: i32, %arg1: memref<2x16x64xf32, #tpu.memory_space<vmem>>, %arg2: memref<192x64xbf16, #tpu.memory_space<vmem>>, %arg3: memref<192x128xbf16, #tpu.memory_space<vmem>>, %arg4: memref<64x64xf32, #tpu.memory_space<vmem>>, %arg5: memref<128x128xf32, #tpu.memory_space<vmem>>, %arg6: memref<1x64xf32, #tpu.memory_space<vmem>>, %arg7: memref<1x64xf32, #tpu.memory_space<vmem>>, %arg8: memref<1x128xf32, #tpu.memory_space<vmem>>, %arg9: memref<1x128xf32, #tpu.memory_space<vmem>>, %arg10: memref<32x128xf32, #tpu.memory_space<vmem>>, %arg11: memref<32x192xf32, #tpu.memory_space<vmem>>, %arg12: memref<32x192xf32, #tpu.memory_space<vmem>>) attributes {dimension_semantics = [#tpu.dimension_semantics<arbitrary>], iteration_bounds = array<i64: 1>, scalar_prefetch = 0 : i64, scratch_operands = 2 : i64, tpu.core_type = #tpu.core_type<tc>, window_params = [{pipeline_mode = #tpu.pipeline_mode<synchronous>, transform_indices = @transform_0, window_bounds = array<i64: 2, 16, 64>}, {pipeline_mode = #tpu.pipeline_mode<synchronous>, transform_indices = @transform_1, window_bounds = array<i64: 192, 64>}, {pipeline_mode = #tpu.pipeline_mode<synchronous>, transform_indices = @transform_2, window_bounds = array<i64: 192, 128>}, {pipeline_mode = #tpu.pipeline_mode<synchronous>, transform_indices = @transform_3, window_bounds = array<i64: 64, 64>}, {pipeline_mode = #tpu.pipeline_mode<synchronous>, transform_indices = @transform_4, window_bounds = array<i64: 128, 128>}, {pipeline_mode = #tpu.pipeline_mode<synchronous>, transform_indices = @transform_5, window_bounds = array<i64: 1, 64>}, {pipeline_mode = #tpu.pipeline_mode<synchronous>, transform_indices = @transform_6, window_bounds = array<i64: 1, 64>}, {pipeline_mode = #tpu.pipeline_mode<synchronous>, transform_indices = @transform_7, window_bounds = array<i64: 1, 128>}, {pipeline_mode = #tpu.pipeline_mode<synchronous>, transform_indices = @transform_8, window_bounds = array<i64: 1, 128>}, {pipeline_mode = #tpu.pipeline_mode<synchronous>, transform_indices = @transform_9, window_bounds = array<i64: 32, 128>}]} {
    %cst = arith.constant 0.000000e+00 : f32
    %0 = vector.broadcast %cst : f32 to vector<32x192xf32>
    %c0 = arith.constant 0 : index
    %c0_0 = arith.constant 0 : index
    %1 = vector.load %arg11[%c0, %c0_0] : memref<32x192xf32, #tpu.memory_space<vmem>>, vector<32x192xf32>
    tpu.vector_store %arg11[%c0, %c0_0], %0 {strides = array<i32>} : memref<32x192xf32, #tpu.memory_space<vmem>>, vector<32x192xf32>,
    %c0_1 = arith.constant 0 : index
    %c0_2 = arith.constant 0 : index
    %c0_3 = arith.constant 0 : index
    %2 = vector.load %arg1[%c0_1, %c0_2, %c0_3] : memref<2x16x64xf32, #tpu.memory_space<vmem>>, vector<1x16x64xf32>
    %3 = vector.shape_cast %2 : vector<1x16x64xf32> to vector<16x64xf32>
    %cst_4 = arith.constant 0.000000e+00 : f32
    %4 = vector.broadcast %cst_4 : f32 to vector<16x64xf32>
    %5 = arith.maximumf %3, %4 : vector<16x64xf32>
    %6 = vector.extract_strided_slice %5 {offsets = [0, 0], sizes = [15, 64], strides = [1, 1]} : vector<16x64xf32> to vector<15x64xf32>
    %c1 = arith.constant 1 : index
    %c0_5 = arith.constant 0 : index
    %7 = vector.load %arg11[%c1, %c0_5] : memref<32x192xf32, #tpu.memory_space<vmem>>, vector<15x64xf32>
    tpu.vector_store %arg11[%c1, %c0_5], %6 {strides = array<i32>} : memref<32x192xf32, #tpu.memory_space<vmem>>, vector<15x64xf32>,
    %c0_6 = arith.constant 0 : index
    %c64 = arith.constant 64 : index
    %8 = vector.load %arg11[%c0_6, %c64] : memref<32x192xf32, #tpu.memory_space<vmem>>, vector<16x64xf32>
    tpu.vector_store %arg11[%c0_6, %c64], %5 {strides = array<i32>} : memref<32x192xf32, #tpu.memory_space<vmem>>, vector<16x64xf32>,
    %9 = vector.extract_strided_slice %5 {offsets = [1, 0], sizes = [15, 64], strides = [1, 1]} : vector<16x64xf32> to vector<15x64xf32>
    %c0_7 = arith.constant 0 : index
    %c128 = arith.constant 128 : index
    %10 = vector.load %arg11[%c0_7, %c128] : memref<32x192xf32, #tpu.memory_space<vmem>>, vector<15x64xf32>
    tpu.vector_store %arg11[%c0_7, %c128], %9 {strides = array<i32>} : memref<32x192xf32, #tpu.memory_space<vmem>>, vector<15x64xf32>,
    %c1_8 = arith.constant 1 : index
    %c0_9 = arith.constant 0 : index
    %c0_10 = arith.constant 0 : index
    %11 = vector.load %arg1[%c1_8, %c0_9, %c0_10] : memref<2x16x64xf32, #tpu.memory_space<vmem>>, vector<1x16x64xf32>
    %12 = vector.shape_cast %11 : vector<1x16x64xf32> to vector<16x64xf32>
    %cst_11 = arith.constant 0.000000e+00 : f32
    %13 = vector.broadcast %cst_11 : f32 to vector<16x64xf32>
    %14 = arith.maximumf %12, %13 : vector<16x64xf32>
    %15 = vector.extract_strided_slice %14 {offsets = [0, 0], sizes = [15, 64], strides = [1, 1]} : vector<16x64xf32> to vector<15x64xf32>
    %c17 = arith.constant 17 : index
    %c0_12 = arith.constant 0 : index
    %16 = vector.load %arg11[%c17, %c0_12] : memref<32x192xf32, #tpu.memory_space<vmem>>, vector<15x64xf32>
    tpu.vector_store %arg11[%c17, %c0_12], %15 {strides = array<i32>} : memref<32x192xf32, #tpu.memory_space<vmem>>, vector<15x64xf32>,
    %c16 = arith.constant 16 : index
    %c64_13 = arith.constant 64 : index
    %17 = vector.load %arg11[%c16, %c64_13] : memref<32x192xf32, #tpu.memory_space<vmem>>, vector<16x64xf32>
    tpu.vector_store %arg11[%c16, %c64_13], %14 {strides = array<i32>} : memref<32x192xf32, #tpu.memory_space<vmem>>, vector<16x64xf32>,
    %18 = vector.extract_strided_slice %14 {offsets = [1, 0], sizes = [15, 64], strides = [1, 1]} : vector<16x64xf32> to vector<15x64xf32>
    %c16_14 = arith.constant 16 : index
    %c128_15 = arith.constant 128 : index
    %19 = vector.load %arg11[%c16_14, %c128_15] : memref<32x192xf32, #tpu.memory_space<vmem>>, vector<15x64xf32>
    tpu.vector_store %arg11[%c16_14, %c128_15], %18 {strides = array<i32>} : memref<32x192xf32, #tpu.memory_space<vmem>>, vector<15x64xf32>,
    %c0_16 = arith.constant 0 : index
    %c0_17 = arith.constant 0 : index
    %20 = vector.load %arg11[%c0_16, %c0_17] : memref<32x192xf32, #tpu.memory_space<vmem>>, vector<32x192xf32>
    %21 = arith.truncf %20 : vector<32x192xf32> to vector<32x192xbf16>
    %c0_18 = arith.constant 0 : index
    %c0_19 = arith.constant 0 : index
    %22 = vector.load %arg2[%c0_18, %c0_19] : memref<192x64xbf16, #tpu.memory_space<vmem>>, vector<192x64xbf16>
    %cst_20 = arith.constant dense<0.000000e+00> : vector<32x64xf32>
    %23 = tpu.matmul %21, %22, %cst_20 {dimension_numbers = #tpu.dot_dimension_numbers<[1], [0], [0], [1], [0, 0, 1, 1], [], []>} : vector<32x192xbf16>, vector<192x64xbf16>, vector<32x64xf32> -> vector<32x64xf32>
    %cst_21 = arith.constant dense<0.000000e+00> : vector<64xf32>
    %24 = vector.multi_reduction <add>, %23, %cst_21 [0] : vector<32x64xf32> to vector<64xf32>
    %25 = vector.shape_cast %24 : vector<64xf32> to vector<1x64xf32>
    %c0_22 = arith.constant 0 : index
    %c0_23 = arith.constant 0 : index
    %26 = vector.load %arg4[%c0_22, %c0_23] : memref<64x64xf32, #tpu.memory_space<vmem>>, vector<64x64xf32>
    %cst_24 = arith.constant dense<0.000000e+00> : vector<1x64xf32>
    %27 = tpu.matmul %25, %26, %cst_24 {dimension_numbers = #tpu.dot_dimension_numbers<[1], [0], [0], [1], [0, 0, 1, 1], [], []>} : vector<1x64xf32>, vector<64x64xf32>, vector<1x64xf32> -> vector<1x64xf32>
    %cst_25 = arith.constant 0.001953125 : f32
    %28 = vector.broadcast %cst_25 : f32 to vector<1x64xf32>
    %29 = arith.mulf %27, %28 : vector<1x64xf32>
    %30 = vector.broadcast %29 : vector<1x64xf32> to vector<32x64xf32>
    %31 = arith.subf %23, %30 : vector<32x64xf32>
    %32 = arith.mulf %31, %31 : vector<32x64xf32>
    %cst_26 = arith.constant dense<0.000000e+00> : vector<64xf32>
    %33 = vector.multi_reduction <add>, %32, %cst_26 [0] : vector<32x64xf32> to vector<64xf32>
    %34 = vector.shape_cast %33 : vector<64xf32> to vector<1x64xf32>
    %c0_27 = arith.constant 0 : index
    %c0_28 = arith.constant 0 : index
    %35 = vector.load %arg4[%c0_27, %c0_28] : memref<64x64xf32, #tpu.memory_space<vmem>>, vector<64x64xf32>
    %cst_29 = arith.constant dense<0.000000e+00> : vector<1x64xf32>
    %36 = tpu.matmul %34, %35, %cst_29 {dimension_numbers = #tpu.dot_dimension_numbers<[1], [0], [0], [1], [0, 0, 1, 1], [], []>} : vector<1x64xf32>, vector<64x64xf32>, vector<1x64xf32> -> vector<1x64xf32>
    %cst_30 = arith.constant 0.001953125 : f32
    %37 = vector.broadcast %cst_30 : f32 to vector<1x64xf32>
    %38 = arith.mulf %36, %37 : vector<1x64xf32>
    %c0_31 = arith.constant 0 : index
    %c0_32 = arith.constant 0 : index
    %39 = vector.load %arg6[%c0_31, %c0_32] : memref<1x64xf32, #tpu.memory_space<vmem>>, vector<1x64xf32>
    %cst_33 = arith.constant 9.99999974E-6 : f32
    %40 = vector.broadcast %cst_33 : f32 to vector<1x64xf32>
    %41 = arith.addf %38, %40 : vector<1x64xf32>
    %42 = math.rsqrt %41 : vector<1x64xf32>
    %43 = arith.mulf %39, %42 : vector<1x64xf32>
    %44 = vector.broadcast %43 : vector<1x64xf32> to vector<32x64xf32>
    %45 = arith.mulf %31, %44 : vector<32x64xf32>
    %c0_34 = arith.constant 0 : index
    %c0_35 = arith.constant 0 : index
    %46 = vector.load %arg7[%c0_34, %c0_35] : memref<1x64xf32, #tpu.memory_space<vmem>>, vector<1x64xf32>
    %47 = vector.broadcast %46 : vector<1x64xf32> to vector<32x64xf32>
    %48 = arith.addf %45, %47 : vector<32x64xf32>
    %cst_36 = arith.constant 0.000000e+00 : f32
    %49 = vector.broadcast %cst_36 : f32 to vector<32x64xf32>
    %50 = arith.maximumf %48, %49 : vector<32x64xf32>
    %cst_37 = arith.constant 0.000000e+00 : f32
    %51 = vector.broadcast %cst_37 : f32 to vector<32x192xf32>
    %c0_38 = arith.constant 0 : index
    %c0_39 = arith.constant 0 : index
    %52 = vector.load %arg12[%c0_38, %c0_39] : memref<32x192xf32, #tpu.memory_space<vmem>>, vector<32x192xf32>
    tpu.vector_store %arg12[%c0_38, %c0_39], %51 {strides = array<i32>} : memref<32x192xf32, #tpu.memory_space<vmem>>, vector<32x192xf32>,
    %53 = vector.extract_strided_slice %50 {offsets = [0, 0], sizes = [16, 64], strides = [1, 1]} : vector<32x64xf32> to vector<16x64xf32>
    %54 = vector.extract_strided_slice %53 {offsets = [0, 0], sizes = [15, 64], strides = [1, 1]} : vector<16x64xf32> to vector<15x64xf32>
    %c1_40 = arith.constant 1 : index
    %c0_41 = arith.constant 0 : index
    %55 = vector.load %arg12[%c1_40, %c0_41] : memref<32x192xf32, #tpu.memory_space<vmem>>, vector<15x64xf32>
    tpu.vector_store %arg12[%c1_40, %c0_41], %54 {strides = array<i32>} : memref<32x192xf32, #tpu.memory_space<vmem>>, vector<15x64xf32>,
    %c0_42 = arith.constant 0 : index
    %c64_43 = arith.constant 64 : index
    %56 = vector.load %arg12[%c0_42, %c64_43] : memref<32x192xf32, #tpu.memory_space<vmem>>, vector<16x64xf32>
    tpu.vector_store %arg12[%c0_42, %c64_43], %53 {strides = array<i32>} : memref<32x192xf32, #tpu.memory_space<vmem>>, vector<16x64xf32>,
    %57 = vector.extract_strided_slice %53 {offsets = [1, 0], sizes = [15, 64], strides = [1, 1]} : vector<16x64xf32> to vector<15x64xf32>
    %c0_44 = arith.constant 0 : index
    %c128_45 = arith.constant 128 : index
    %58 = vector.load %arg12[%c0_44, %c128_45] : memref<32x192xf32, #tpu.memory_space<vmem>>, vector<15x64xf32>
    tpu.vector_store %arg12[%c0_44, %c128_45], %57 {strides = array<i32>} : memref<32x192xf32, #tpu.memory_space<vmem>>, vector<15x64xf32>,
    %59 = vector.extract_strided_slice %50 {offsets = [16, 0], sizes = [16, 64], strides = [1, 1]} : vector<32x64xf32> to vector<16x64xf32>
    %60 = vector.extract_strided_slice %59 {offsets = [0, 0], sizes = [15, 64], strides = [1, 1]} : vector<16x64xf32> to vector<15x64xf32>
    %c17_46 = arith.constant 17 : index
    %c0_47 = arith.constant 0 : index
    %61 = vector.load %arg12[%c17_46, %c0_47] : memref<32x192xf32, #tpu.memory_space<vmem>>, vector<15x64xf32>
    tpu.vector_store %arg12[%c17_46, %c0_47], %60 {strides = array<i32>} : memref<32x192xf32, #tpu.memory_space<vmem>>, vector<15x64xf32>,
    %c16_48 = arith.constant 16 : index
    %c64_49 = arith.constant 64 : index
    %62 = vector.load %arg12[%c16_48, %c64_49] : memref<32x192xf32, #tpu.memory_space<vmem>>, vector<16x64xf32>
    tpu.vector_store %arg12[%c16_48, %c64_49], %59 {strides = array<i32>} : memref<32x192xf32, #tpu.memory_space<vmem>>, vector<16x64xf32>,
    %63 = vector.extract_strided_slice %59 {offsets = [1, 0], sizes = [15, 64], strides = [1, 1]} : vector<16x64xf32> to vector<15x64xf32>
    %c16_50 = arith.constant 16 : index
    %c128_51 = arith.constant 128 : index
    %64 = vector.load %arg12[%c16_50, %c128_51] : memref<32x192xf32, #tpu.memory_space<vmem>>, vector<15x64xf32>
    tpu.vector_store %arg12[%c16_50, %c128_51], %63 {strides = array<i32>} : memref<32x192xf32, #tpu.memory_space<vmem>>, vector<15x64xf32>,
    %c0_52 = arith.constant 0 : index
    %c0_53 = arith.constant 0 : index
    %65 = vector.load %arg12[%c0_52, %c0_53] : memref<32x192xf32, #tpu.memory_space<vmem>>, vector<32x192xf32>
    %66 = arith.truncf %65 : vector<32x192xf32> to vector<32x192xbf16>
    %c0_54 = arith.constant 0 : index
    %c0_55 = arith.constant 0 : index
    %67 = vector.load %arg3[%c0_54, %c0_55] : memref<192x128xbf16, #tpu.memory_space<vmem>>, vector<192x128xbf16>
    %cst_56 = arith.constant dense<0.000000e+00> : vector<32x128xf32>
    %68 = tpu.matmul %66, %67, %cst_56 {dimension_numbers = #tpu.dot_dimension_numbers<[1], [0], [0], [1], [0, 0, 1, 1], [], []>} : vector<32x192xbf16>, vector<192x128xbf16>, vector<32x128xf32> -> vector<32x128xf32>
    %cst_57 = arith.constant dense<0.000000e+00> : vector<128xf32>
    %69 = vector.multi_reduction <add>, %68, %cst_57 [0] : vector<32x128xf32> to vector<128xf32>
    %70 = vector.shape_cast %69 : vector<128xf32> to vector<1x128xf32>
    %c0_58 = arith.constant 0 : index
    %c0_59 = arith.constant 0 : index
    %71 = vector.load %arg5[%c0_58, %c0_59] : memref<128x128xf32, #tpu.memory_space<vmem>>, vector<128x128xf32>
    %cst_60 = arith.constant dense<0.000000e+00> : vector<1x128xf32>
    %72 = tpu.matmul %70, %71, %cst_60 {dimension_numbers = #tpu.dot_dimension_numbers<[1], [0], [0], [1], [0, 0, 1, 1], [], []>} : vector<1x128xf32>, vector<128x128xf32>, vector<1x128xf32> -> vector<1x128xf32>
    %cst_61 = arith.constant 0.001953125 : f32
    %73 = vector.broadcast %cst_61 : f32 to vector<1x128xf32>
    %74 = arith.mulf %72, %73 : vector<1x128xf32>
    %75 = vector.broadcast %74 : vector<1x128xf32> to vector<32x128xf32>
    %76 = arith.subf %68, %75 : vector<32x128xf32>
    %77 = arith.mulf %76, %76 : vector<32x128xf32>
    %cst_62 = arith.constant dense<0.000000e+00> : vector<128xf32>
    %78 = vector.multi_reduction <add>, %77, %cst_62 [0] : vector<32x128xf32> to vector<128xf32>
    %79 = vector.shape_cast %78 : vector<128xf32> to vector<1x128xf32>
    %c0_63 = arith.constant 0 : index
    %c0_64 = arith.constant 0 : index
    %80 = vector.load %arg5[%c0_63, %c0_64] : memref<128x128xf32, #tpu.memory_space<vmem>>, vector<128x128xf32>
    %cst_65 = arith.constant dense<0.000000e+00> : vector<1x128xf32>
    %81 = tpu.matmul %79, %80, %cst_65 {dimension_numbers = #tpu.dot_dimension_numbers<[1], [0], [0], [1], [0, 0, 1, 1], [], []>} : vector<1x128xf32>, vector<128x128xf32>, vector<1x128xf32> -> vector<1x128xf32>
    %cst_66 = arith.constant 0.001953125 : f32
    %82 = vector.broadcast %cst_66 : f32 to vector<1x128xf32>
    %83 = arith.mulf %81, %82 : vector<1x128xf32>
    %c0_67 = arith.constant 0 : index
    %c0_68 = arith.constant 0 : index
    %84 = vector.load %arg8[%c0_67, %c0_68] : memref<1x128xf32, #tpu.memory_space<vmem>>, vector<1x128xf32>
    %cst_69 = arith.constant 9.99999974E-6 : f32
    %85 = vector.broadcast %cst_69 : f32 to vector<1x128xf32>
    %86 = arith.addf %83, %85 : vector<1x128xf32>
    %87 = math.rsqrt %86 : vector<1x128xf32>
    %88 = arith.mulf %84, %87 : vector<1x128xf32>
    %89 = vector.broadcast %88 : vector<1x128xf32> to vector<32x128xf32>
    %90 = arith.mulf %76, %89 : vector<32x128xf32>
    %c0_70 = arith.constant 0 : index
    %c0_71 = arith.constant 0 : index
    %91 = vector.load %arg9[%c0_70, %c0_71] : memref<1x128xf32, #tpu.memory_space<vmem>>, vector<1x128xf32>
    %92 = vector.broadcast %91 : vector<1x128xf32> to vector<32x128xf32>
    %93 = arith.addf %90, %92 : vector<32x128xf32>
    %c0_72 = arith.constant 0 : index
    %c0_73 = arith.constant 0 : index
    %94 = vector.load %arg10[%c0_72, %c0_73] : memref<32x128xf32, #tpu.memory_space<vmem>>, vector<32x128xf32>
    tpu.vector_store %arg10[%c0_72, %c0_73], %93 {strides = array<i32>} : memref<32x128xf32, #tpu.memory_space<vmem>>, vector<32x128xf32>,
    return
  }
  func.func @transform_0(%arg0: i32) -> (i32, i32, i32) {
    %c0_i32 = arith.constant 0 : i32
    %c0_i32_0 = arith.constant 0 : i32
    %c0_i32_1 = arith.constant 0 : i32
    %c0_i32_2 = arith.constant 0 : i32
    return %c0_i32, %c0_i32_0, %c0_i32_1 : i32, i32, i32
  }
  func.func @transform_1(%arg0: i32) -> (i32, i32) {
    %c0_i32 = arith.constant 0 : i32
    %c0_i32_0 = arith.constant 0 : i32
    %c0_i32_1 = arith.constant 0 : i32
    return %c0_i32, %c0_i32_0 : i32, i32
  }
  func.func @transform_2(%arg0: i32) -> (i32, i32) {
    %c0_i32 = arith.constant 0 : i32
    %c0_i32_0 = arith.constant 0 : i32
    %c0_i32_1 = arith.constant 0 : i32
    return %c0_i32, %c0_i32_0 : i32, i32
  }
  func.func @transform_3(%arg0: i32) -> (i32, i32) {
    %c0_i32 = arith.constant 0 : i32
    %c0_i32_0 = arith.constant 0 : i32
    %c0_i32_1 = arith.constant 0 : i32
    return %c0_i32, %c0_i32_0 : i32, i32
  }
  func.func @transform_4(%arg0: i32) -> (i32, i32) {
    %c0_i32 = arith.constant 0 : i32
    %c0_i32_0 = arith.constant 0 : i32
    %c0_i32_1 = arith.constant 0 : i32
    return %c0_i32, %c0_i32_0 : i32, i32
  }
  func.func @transform_5(%arg0: i32) -> (i32, i32) {
    %c0_i32 = arith.constant 0 : i32
    %c0_i32_0 = arith.constant 0 : i32
    %c0_i32_1 = arith.constant 0 : i32
    return %c0_i32, %c0_i32_0 : i32, i32
  }
  func.func @transform_6(%arg0: i32) -> (i32, i32) {
    %c0_i32 = arith.constant 0 : i32
    %c0_i32_0 = arith.constant 0 : i32
    %c0_i32_1 = arith.constant 0 : i32
    return %c0_i32, %c0_i32_0 : i32, i32
  }
  func.func @transform_7(%arg0: i32) -> (i32, i32) {
    %c0_i32 = arith.constant 0 : i32
    %c0_i32_0 = arith.constant 0 : i32
    %c0_i32_1 = arith.constant 0 : i32
    return %c0_i32, %c0_i32_0 : i32, i32
  }
  func.func @transform_8(%arg0: i32) -> (i32, i32) {
    %c0_i32 = arith.constant 0 : i32
    %c0_i32_0 = arith.constant 0 : i32
    %c0_i32_1 = arith.constant 0 : i32
    return %c0_i32, %c0_i32_0 : i32, i32
  }
  func.func @transform_9(%arg0: i32) -> (i32, i32) {
    %c0_i32 = arith.constant 0 : i32
    %c0_i32_0 = arith.constant 0 : i32
    %c0_i32_1 = arith.constant 0 : i32
    return %c0_i32, %c0_i32_0 : i32, i32
  }
}

</mosaic_0001>

<llo_original>
// kernel: tpu_custom_call.1
$region0: #{tpu_custom_call.1}
  #allocation0 [shape = 'u32[]', space=smem, size = 0x4, offset = 0x4, fixed_abs, tag = 'smem constant byte address 0x4 - core index']
  #allocation1 [shape = 'u32[144,128]{1,0:T(1,128)}', space=vmem, size = 0x12000, scoped, tag = 'internal scratch']
  #allocation2 [shape = 'f32[32,192]{1,0:T(8,128)}', space=vmem, size = 0x8000, scoped, tag = 'scratch operand']
  #allocation3 [shape = 'f32[32,192]{1,0:T(8,128)}', space=vmem, size = 0x8000, scoped, tag = 'scratch operand']
  %s0 = inlined_call_operand.vmem [shape: f32[2,16,64], index: 0, kind: input, shape index: {}]
  %s1 = inlined_call_operand.vmem [shape: bf16[192,64], index: 1, kind: input, shape index: {}]
  %s2 = inlined_call_operand.hbm [shape: bf16[192,128], index: 2, kind: input, shape index: {}]
  %s3 = inlined_call_operand.hbm [shape: f32[64,64], index: 3, kind: input, shape index: {}]
  %s4 = inlined_call_operand.vmem [shape: f32[128,128], index: 4, kind: input, shape index: {}]
  %s5 = inlined_call_operand.vmem [shape: f32[1,64], index: 5, kind: input, shape index: {}]
  %s6 = inlined_call_operand.vmem [shape: f32[1,64], index: 6, kind: input, shape index: {}]
  %s7 = inlined_call_operand.vmem [shape: f32[1,128], index: 7, kind: input, shape index: {}]
  %s8 = inlined_call_operand.vmem [shape: f32[1,128], index: 8, kind: input, shape index: {}]
  %s9 = inlined_call_operand.hbm [shape: f32[32,128], index: 9, kind: output, shape index: {}]
  %s10 = sld [smem:[#allocation0]]
  $region54: #{tpu_custom_call.1} parent=0
    _
  %s12 = ssub.s32 1, %s10
  %s13 = scalar_select 0, %s12, %s10
  $region1: #{tpu_custom_call.1} parent=0
    #allocation4 [shape = 'u8[49152]{0}', space=vmem, size = 0xc000, scoped, tag = 'input window, operand 2, single buffered']
    #allocation5 [shape = 's32[1]{0}', space=sflag, size = 0x4, scoped, tag = 'scoped memory for tpu_custom_call.1']
    #allocation6 [shape = 's32[1]{0}', space=sflag, size = 0x4, scoped, tag = 'scoped memory for tpu_custom_call.1']
    #allocation7 [shape = 'u8[32768]{0}', space=vmem, size = 0x8000, scoped, tag = 'input window, operand 3, single buffered']
    #allocation8 [shape = 's32[1]{0}', space=sflag, size = 0x4, scoped, tag = 'scoped memory for tpu_custom_call.1']
    #allocation9 [shape = 'u8[16384]{0}', space=vmem, size = 0x4000, scoped, tag = 'output window, operand 0, single buffered']
    %14 = vsyncpa [#allocation5], 0
    %15 = vsyncpa [#allocation8], 0
    %16 = vsyncpa [#allocation6], 0
    // Predicated region
    $region2: #{tpu_custom_call.1} parent=1 // pred_check
      _
    $region3: #{tpu_custom_call.1} parent=1 // pred_check_branch
      %18 = sbr.rel (0) target = $region5
    $region4: #{tpu_custom_call.1} parent=1 // pred_region
      _
    $region5: #{tpu_custom_call.1} parent=1 // pred_fallthru
      _
    // Predicated region
    $region6: #{tpu_custom_call.1} parent=1 // pred_check
      _
    $region7: #{tpu_custom_call.1} parent=1 // pred_check_branch
      %20 = sbr.rel (0) target = $region9
    $region8: #{tpu_custom_call.1} parent=1 // pred_region
      _
    $region9: #{tpu_custom_call.1} parent=1 // pred_fallthru
      _
    // Predicated region
    $region10: #{tpu_custom_call.1} parent=1 // pred_check
      _
    $region11: #{tpu_custom_call.1} parent=1 // pred_check_branch
      %22 = sbr.rel (0) target = $region13
    $region12: #{tpu_custom_call.1} parent=1 // pred_region
      %s24 = ssub.s32 1536, 1536
      %25 = vsyncadd [#allocation5], %s24
      %s26 = sshll.u32 [#allocation4], 4
      %s27 = int_to_ptr.vmem [resolvable:$true] %s26
      %32 = dma.hbm_to_vmem [thread:$0]  %s2, 1536, %s27, [#allocation5], 64, 64, 4
    $region13: #{tpu_custom_call.1} parent=1 // pred_fallthru
      _
    // Predicated region
    $region14: #{tpu_custom_call.1} parent=1 // pred_check
      _
    $region15: #{tpu_custom_call.1} parent=1 // pred_check_branch
      %34 = sbr.rel (0) target = $region17
    $region16: #{tpu_custom_call.1} parent=1 // pred_region
      %s36 = ssub.s32 1024, 1024
      %37 = vsyncadd [#allocation8], %s36
      %s38 = sshll.u32 [#allocation7], 4
      %s39 = int_to_ptr.vmem [resolvable:$true] %s38
      %44 = dma.hbm_to_vmem [thread:$0]  %s3, 1024, %s39, [#allocation8], 128, 128, 8
    $region17: #{tpu_custom_call.1} parent=1 // pred_fallthru
      _
    // Predicated region
    $region18: #{tpu_custom_call.1} parent=1 // pred_check
      _
    $region19: #{tpu_custom_call.1} parent=1 // pred_check_branch
      %46 = sbr.rel (0) target = $region21
    $region20: #{tpu_custom_call.1} parent=1 // pred_region
      _
    $region21: #{tpu_custom_call.1} parent=1 // pred_fallthru
      _
    // Predicated region
    $region22: #{tpu_custom_call.1} parent=1 // pred_check
      _
    $region23: #{tpu_custom_call.1} parent=1 // pred_check_branch
      %48 = sbr.rel (0) target = $region25
    $region24: #{tpu_custom_call.1} parent=1 // pred_region
      _
    $region25: #{tpu_custom_call.1} parent=1 // pred_fallthru
      _
    // Predicated region
    $region26: #{tpu_custom_call.1} parent=1 // pred_check
      _
    $region27: #{tpu_custom_call.1} parent=1 // pred_check_branch
      %50 = sbr.rel (0) target = $region29
    $region28: #{tpu_custom_call.1} parent=1 // pred_region
      _
    $region29: #{tpu_custom_call.1} parent=1 // pred_fallthru
      _
    // Predicated region
    $region30: #{tpu_custom_call.1} parent=1 // pred_check
      _
    $region31: #{tpu_custom_call.1} parent=1 // pred_check_branch
      %52 = sbr.rel (0) target = $region33
    $region32: #{tpu_custom_call.1} parent=1 // pred_region
      _
    $region33: #{tpu_custom_call.1} parent=1 // pred_fallthru
      _
    // Predicated region
    $region34: #{tpu_custom_call.1} parent=1 // pred_check
      _
    $region35: #{tpu_custom_call.1} parent=1 // pred_check_branch
      %54 = sbr.rel (0) target = $region37
    $region36: #{tpu_custom_call.1} parent=1 // pred_region
      _
    $region37: #{tpu_custom_call.1} parent=1 // pred_fallthru
      _
    // Predicated region
    $region38: #{tpu_custom_call.1} parent=1 // pred_check
      _
    $region39: #{tpu_custom_call.1} parent=1 // pred_check_branch
      %56 = sbr.rel (0) target = $region41
    $region40: #{tpu_custom_call.1} parent=1 // pred_region
      %57 = dma.done [#allocation5], 1536
    $region41: #{tpu_custom_call.1} parent=1 // pred_fallthru
      _
    // Predicated region
    $region42: #{tpu_custom_call.1} parent=1 // pred_check
      _
    $region43: #{tpu_custom_call.1} parent=1 // pred_check_branch
      %59 = sbr.rel (0) target = $region45
    $region44: #{tpu_custom_call.1} parent=1 // pred_region
      %60 = dma.done [#allocation8], 1024
    $region45: #{tpu_custom_call.1} parent=1 // pred_fallthru
      _
    %62 = vst [vmem:[#allocation2] sm:$0xff] 0.0
    %vm63 = vcmask 523264
    %64 = vst.msk [vmem:[#allocation2 + $0x8] sm:$0xff] %vm63, 0.0
    %65 = vst [vmem:[#allocation2 + $0x10] sm:$0xff] 0.0
    %66 = vst.msk [vmem:[#allocation2 + $0x18] sm:$0xff] %vm63, 0.0
    %67 = vst [vmem:[#allocation2 + $0x20] sm:$0xff] 0.0
    %68 = vst.msk [vmem:[#allocation2 + $0x28] sm:$0xff] %vm63, 0.0
    %69 = vst [vmem:[#allocation2 + $0x30] sm:$0xff] 0.0
    %70 = vst.msk [vmem:[#allocation2 + $0x38] sm:$0xff] %vm63, 0.0
    %v71 = vld [vmem:[%s0] sm:$0xff]
    %v72 = vld [vmem:[%s0 + $0x8] sm:$0xff]
    %v73 = vmax.f32 %v71, 0.0
    %v74 = vmax.f32 %v72, 0.0
    %vm77 = vcmask 1040384
    %v78 = vrot.slane %v73, 7
    %v79 = vrot.slane %v74, 7
    %v80 = vsel %vm77, %v78, %v79
    %vm83 = vcmask 523265
    %84 = vst.msk [vmem:[#allocation2] sm:$0xfe] %vm83, %v78
    %85 = vst.msk [vmem:[#allocation2 + $0x10] sm:$0xff] %vm63, %v80
    %86 = vrot.lane.b32.xlu0 %v73, 64
    %v87 = vpop.permute.xlu0 %86
    %88 = vrot.lane.b32.xlu0 %v74, 64
    %v89 = vpop.permute.xlu0 %88
    %vm92 = vcmask 1048064
    %93 = vst.msk [vmem:[#allocation2] sm:$0xff] %vm92, %v87
    %94 = vst.msk [vmem:[#allocation2 + $0x10] sm:$0xff] %vm92, %v89
    %vm95 = vcmask 1046528
    %v96 = vrot.slane %v73, 1
    %v97 = vrot.slane %v74, 1
    %v98 = vsel %vm95, %v96, %v97
    %101 = vst.msk [vmem:[#allocation2 + $0x8] sm:$0xff] %vm63, %v98
    %vm102 = vcmask 522240
    %103 = vst.msk [vmem:[#allocation2 + $0x18] sm:$0x7f] %vm102, %v97
    %s104 = scalar_lea.vmem %s0, 16
    %v105 = vld [vmem:[%s104] sm:$0xff]
    %v106 = vld [vmem:[%s104 + $0x8] sm:$0xff]
    %v107 = vmax.f32 %v105, 0.0
    %v108 = vmax.f32 %v106, 0.0
    %v111 = vrot.slane %v107, 7
    %v112 = vrot.slane %v108, 7
    %v113 = vsel %vm77, %v111, %v112
    %116 = vst.msk [vmem:[#allocation2 + $0x20] sm:$0xfe] %vm83, %v111
    %117 = vst.msk [vmem:[#allocation2 + $0x30] sm:$0xff] %vm63, %v113
    %118 = vrot.lane.b32.xlu0 %v107, 64
    %v119 = vpop.permute.xlu0 %118
    %120 = vrot.lane.b32.xlu0 %v108, 64
    %v121 = vpop.permute.xlu0 %120
    %124 = vst.msk [vmem:[#allocation2 + $0x20] sm:$0xff] %vm92, %v119
    %125 = vst.msk [vmem:[#allocation2 + $0x30] sm:$0xff] %vm92, %v121
    %v126 = vrot.slane %v107, 1
    %v127 = vrot.slane %v108, 1
    %v128 = vsel %vm95, %v126, %v127
    %131 = vst.msk [vmem:[#allocation2 + $0x28] sm:$0xff] %vm63, %v128
    %132 = vst.msk [vmem:[#allocation2 + $0x38] sm:$0x7f] %vm102, %v127
    %v133 = vld [vmem:[#allocation2] sm:$0xff]
    %v134 = vld [vmem:[#allocation2 + $0x8] sm:$0xff]
    %v135 = vld [vmem:[#allocation2 + $0x10] sm:$0xff]
    %v136 = vld [vmem:[#allocation2 + $0x18] sm:$0xff]
    %v137 = vld [vmem:[#allocation2 + $0x20] sm:$0xff]
    %v138 = vld [vmem:[#allocation2 + $0x28] sm:$0xff]
    %v139 = vld [vmem:[#allocation2 + $0x30] sm:$0xff]
    %v140 = vld [vmem:[#allocation2 + $0x38] sm:$0xff]
    %v141 = vpack.c.bf16 %v135, %v133
    %v142 = vpack.c.bf16 %v136, %v134
    %v143 = vpack.c.bf16 %v139, %v137
    %v144 = vpack.c.bf16 %v140, %v138
    %v145 = vld [vmem:[%s1] sm:$0xf]
    %v146 = vld [vmem:[%s1 + $0x4] sm:$0xf]
    %v147 = vld [vmem:[%s1 + $0x8] sm:$0xf]
    %v148 = vld [vmem:[%s1 + $0xc] sm:$0xf]
    %v149 = vld [vmem:[%s1 + $0x10] sm:$0xf]
    %v150 = vld [vmem:[%s1 + $0x14] sm:$0xf]
    %v151 = vld [vmem:[%s1 + $0x18] sm:$0xf]
    %v152 = vld [vmem:[%s1 + $0x1c] sm:$0xf]
    %v153 = vld [vmem:[%s1 + $0x20] sm:$0xf]
    %v154 = vld [vmem:[%s1 + $0x24] sm:$0xf]
    %v155 = vld [vmem:[%s1 + $0x28] sm:$0xf]
    %v156 = vld [vmem:[%s1 + $0x2c] sm:$0xf]
    %v157 = vld [vmem:[%s1 + $0x30] sm:$0xf]
    %v158 = vld [vmem:[%s1 + $0x34] sm:$0xf]
    %v159 = vld [vmem:[%s1 + $0x38] sm:$0xf]
    %v160 = vld [vmem:[%s1 + $0x3c] sm:$0xf]
    %v161 = vld [vmem:[%s1 + $0x40] sm:$0xf]
    %v162 = vld [vmem:[%s1 + $0x44] sm:$0xf]
    %v163 = vld [vmem:[%s1 + $0x48] sm:$0xf]
    %v164 = vld [vmem:[%s1 + $0x4c] sm:$0xf]
    %v165 = vld [vmem:[%s1 + $0x50] sm:$0xf]
    %v166 = vld [vmem:[%s1 + $0x54] sm:$0xf]
    %v167 = vld [vmem:[%s1 + $0x58] sm:$0xf]
    %v168 = vld [vmem:[%s1 + $0x5c] sm:$0xf]
    %v193 = vunpack.c.l.b16 %v145
    %v194 = vunpack.c.l.b16 %v146
    %v195 = vunpack.c.l.b16 %v147
    %v196 = vunpack.c.l.b16 %v148
    %v197 = vunpack.c.l.b16 %v149
    %v198 = vunpack.c.l.b16 %v150
    %v199 = vunpack.c.l.b16 %v151
    %v200 = vunpack.c.l.b16 %v152
    %v201 = vunpack.c.l.b16 %v153
    %v202 = vunpack.c.l.b16 %v154
    %v203 = vunpack.c.l.b16 %v155
    %v204 = vunpack.c.l.b16 %v156
    %v205 = vunpack.c.l.b16 %v157
    %v206 = vunpack.c.l.b16 %v158
    %v207 = vunpack.c.l.b16 %v159
    %v208 = vunpack.c.l.b16 %v160
    %v209 = vunpack.c.l.b16 %v161
    %v210 = vunpack.c.l.b16 %v162
    %v211 = vunpack.c.l.b16 %v163
    %v212 = vunpack.c.l.b16 %v164
    %v213 = vunpack.c.l.b16 %v165
    %v214 = vunpack.c.l.b16 %v166
    %v215 = vunpack.c.l.b16 %v167
    %v216 = vunpack.c.l.b16 %v168
    %v217 = vpack.c.b16 %v194, %v193
    %v218 = vpack.c.b16 %v196, %v195
    %v219 = vpack.c.b16 %v198, %v197
    %v220 = vpack.c.b16 %v200, %v199
    %v221 = vpack.c.b16 %v202, %v201
    %v222 = vpack.c.b16 %v204, %v203
    %v223 = vpack.c.b16 %v206, %v205
    %v224 = vpack.c.b16 %v208, %v207
    %v225 = vpack.c.b16 %v210, %v209
    %v226 = vpack.c.b16 %v212, %v211
    %v227 = vpack.c.b16 %v214, %v213
    %v228 = vpack.c.b16 %v216, %v215
    %v242 = vsel %vm63, %v142, 0
    %v245 = vsel %vm63, %v144, 0
    %247 = vmatprep.subr.bf16.mxu0 0
    %248 = vmatpush1.bf16.msra.mxu0 %v224
    %249 = vmatprep.subr.bf16.mxu0 0
    %250 = vmatpush1.bf16.msra.mxu0 %v223
    %251 = vmatprep.subr.bf16.mxu0 0
    %252 = vmatpush1.bf16.msra.mxu0 %v222
    %253 = vmatprep.subr.bf16.mxu0 0
    %254 = vmatpush1.bf16.msra.mxu0 %v221
    %255 = vmatprep.subr.bf16.mxu0 0
    %256 = vmatpush1.bf16.msra.mxu0 %v220
    %257 = vmatprep.subr.bf16.mxu0 0
    %258 = vmatpush1.bf16.msra.mxu0 %v219
    %259 = vmatprep.subr.bf16.mxu0 0
    %260 = vmatpush1.bf16.msra.mxu0 %v218
    %261 = vmatprep.subr.bf16.mxu0 0
    %262 = vmatpush1.bf16.msra.mxu0 %v217
    %263 = vmatprep.subr.bf16.mxu0 0
    %264 = vmatpush2.bf16.msra.mxu0 0
    %265 = vmatprep.subr.bf16.mxu0 0
    %266 = vmatpush2.bf16.msra.mxu0 0
    %267 = vmatprep.subr.bf16.mxu0 0
    %268 = vmatpush2.bf16.msra.mxu0 0
    %269 = vmatprep.subr.bf16.mxu0 0
    %270 = vmatpush2.bf16.msra.mxu0 0
    %271 = vmatprep.subr.bf16.mxu0 0
    %272 = vmatpush2.bf16.msra.mxu0 %v228
    %273 = vmatprep.subr.bf16.mxu0 0
    %274 = vmatpush2.bf16.msra.mxu0 %v227
    %275 = vmatprep.subr.bf16.mxu0 0
    %276 = vmatpush2.bf16.msra.mxu0 %v226
    %277 = vmatprep.subr.bf16.mxu0 0
    %278 = vmatpush2.bf16.msra.mxu0 %v225
    %279 = vmatprep.mubr.bf16.mxu0 %v242
    %280 = vmatmul.mubr.bf16.gmra.mxu0 %v141
    %v281 = vpop.f32.mrf.mxu0
    %v282 = vadd.f32 0.0, %v281
    %v283 = vpop.f32.mrf.mxu0
    %v284 = vpop.f32.mrf.mxu0
    %v285 = vadd.f32 0.0, %v284
    %v286 = vpop.f32.mrf.mxu0
    %287 = vmatprep.mubr.bf16.mxu0 %v245
    %288 = vmatmul.mubr.bf16.gmra.mxu0 %v143
    %v289 = vpop.f32.mrf.mxu0
    %v290 = vadd.f32 0.0, %v289
    %v291 = vpop.f32.mrf.mxu0
    %v292 = vpop.f32.mrf.mxu0
    %v293 = vadd.f32 0.0, %v292
    %v294 = vpop.f32.mrf.mxu0
    %295 = vdwg.mxu0
    %v296 = vsel %vm63, %v282, 0.0
    %v297 = vsel %vm63, %v285, 0.0
    %v298 = vadd.f32 %v296, %v297
    %v299 = vsel %vm63, %v290, 0.0
    %v300 = vadd.f32 %v298, %v299
    %v301 = vsel %vm63, %v293, 0.0
    %v302 = vadd.f32 %v300, %v301
    %v303 = vrot.slane %v302, 4
    %v304 = vadd.f32 %v302, %v303
    %v305 = vrot.slane %v304, 2
    %v306 = vadd.f32 %v304, %v305
    %v307 = vrot.slane %v306, 1
    %v308 = vadd.f32 %v306, %v307
    %v309 = vld [vmem:[#allocation7] sm:$0xff]
    %v310 = vld [vmem:[#allocation7 + $0x8] sm:$0xff]
    %v311 = vld [vmem:[#allocation7 + $0x10] sm:$0xff]
    %v312 = vld [vmem:[#allocation7 + $0x18] sm:$0xff]
    %v313 = vld [vmem:[#allocation7 + $0x20] sm:$0xff]
    %v314 = vld [vmem:[#allocation7 + $0x28] sm:$0xff]
    %v315 = vld [vmem:[#allocation7 + $0x30] sm:$0xff]
    %v316 = vld [vmem:[#allocation7 + $0x38] sm:$0xff]
    %v318 = vsel %vm63, %v308, 0
    %320 = vmatprep.subr.mxu0 0.0
    %321 = vmatpush1.msra.mxu0 0.0
    %322 = vmatprep.subr.mxu0 0.0
    %323 = vmatpush1.msra.mxu0 0.0
    %324 = vmatprep.subr.mxu0 0.0
    %325 = vmatpush1.msra.mxu0 0.0
    %326 = vmatprep.subr.mxu0 0.0
    %327 = vmatpush1.msra.mxu0 0.0
    %328 = vmatprep.subr.mxu0 0.0
    %329 = vmatpush1.msra.mxu0 0.0
    %330 = vmatprep.subr.mxu0 0.0
    %331 = vmatpush1.msra.mxu0 0.0
    %332 = vmatprep.subr.mxu0 0.0
    %333 = vmatpush1.msra.mxu0 0.0
    %334 = vmatprep.subr.mxu0 0.0
    %335 = vmatpush1.msra.mxu0 0.0
    %336 = vmatprep.subr.mxu0 0.0
    %337 = vmatpush1.msra.mxu0 %v316
    %338 = vmatprep.subr.mxu0 0.0
    %339 = vmatpush1.msra.mxu0 %v315
    %340 = vmatprep.subr.mxu0 0.0
    %341 = vmatpush1.msra.mxu0 %v314
    %342 = vmatprep.subr.mxu0 0.0
    %343 = vmatpush1.msra.mxu0 %v313
    %344 = vmatprep.subr.mxu0 0.0
    %345 = vmatpush1.msra.mxu0 %v312
    %346 = vmatprep.subr.mxu0 0.0
    %347 = vmatpush1.msra.mxu0 %v311
    %348 = vmatprep.subr.mxu0 0.0
    %349 = vmatpush1.msra.mxu0 %v310
    %350 = vmatprep.subr.mxu0 0.0
    %351 = vmatpush1.msra.mxu0 %v309
    %352 = vmatprep.subr.mxu0 0.0
    %353 = vmatpush2.msra.mxu0 0.0
    %354 = vmatprep.subr.mxu0 0.0
    %355 = vmatpush2.msra.mxu0 0.0
    %356 = vmatprep.subr.mxu0 0.0
    %357 = vmatpush2.msra.mxu0 0.0
    %358 = vmatprep.subr.mxu0 0.0
    %359 = vmatpush2.msra.mxu0 0.0
    %360 = vmatprep.subr.mxu0 0.0
    %361 = vmatpush2.msra.mxu0 0.0
    %362 = vmatprep.subr.mxu0 0.0
    %363 = vmatpush2.msra.mxu0 0.0
    %364 = vmatprep.subr.mxu0 0.0
    %365 = vmatpush2.msra.mxu0 0.0
    %366 = vmatprep.subr.mxu0 0.0
    %367 = vmatpush2.msra.mxu0 0.0
    %368 = vmatprep.subr.mxu0 0.0
    %369 = vmatpush2.msra.mxu0 0.0
    %370 = vmatprep.subr.mxu0 0.0
    %371 = vmatpush2.msra.mxu0 0.0
    %372 = vmatprep.subr.mxu0 0.0
    %373 = vmatpush2.msra.mxu0 0.0
    %374 = vmatprep.subr.mxu0 0.0
    %375 = vmatpush2.msra.mxu0 0.0
    %376 = vmatprep.subr.mxu0 0.0
    %377 = vmatpush2.msra.mxu0 0.0
    %378 = vmatprep.subr.mxu0 0.0
    %379 = vmatpush2.msra.mxu0 0.0
    %380 = vmatprep.subr.mxu0 0.0
    %381 = vmatpush2.msra.mxu0 0.0
    %382 = vmatprep.subr.mxu0 0.0
    %383 = vmatpush2.msra.mxu0 0.0
    %384 = vmatprep.mubr.f32.mxu0 0.0
    %385 = vmatmul.mubr.f32.gmra.mxu0 %v318
    %v386 = vpop.f32.mrf.mxu0
    %v387 = vadd.f32 0.0, %v386
    %v388 = vpop.f32.mrf.mxu0
    %389 = vdwg.mxu0
    %v390 = vmul.f32 %v387, 0.001953125
    %v391 = vlaneseq
    %v392 = vshrl.u32 %v391, 7
    %v393 = vsub.s32 0, %v392
    %v394 = vrot.slane %v390, %v393
    %v395 = vsub.f32 %v282, %v394
    %v396 = vsub.f32 %v285, %v394
    %v397 = vsub.f32 %v290, %v394
    %v398 = vsub.f32 %v293, %v394
    %v399 = vmul.f32 %v395, %v395
    %v400 = vmul.f32 %v396, %v396
    %v401 = vmul.f32 %v397, %v397
    %v402 = vmul.f32 %v398, %v398
    %v403 = vsel %vm63, %v399, 0.0
    %v404 = vsel %vm63, %v400, 0.0
    %v405 = vadd.f32 %v403, %v404
    %v406 = vsel %vm63, %v401, 0.0
    %v407 = vadd.f32 %v405, %v406
    %v408 = vsel %vm63, %v402, 0.0
    %v409 = vadd.f32 %v407, %v408
    %v410 = vrot.slane %v409, 4
    %v411 = vadd.f32 %v409, %v410
    %v412 = vrot.slane %v411, 2
    %v413 = vadd.f32 %v411, %v412
    %v414 = vrot.slane %v413, 1
    %v415 = vadd.f32 %v413, %v414
    %v417 = vsel %vm63, %v415, 0
    %419 = vmatprep.subr.mxu0 0.0
    %420 = vmatpush1.msra.mxu0 0.0
    %421 = vmatprep.subr.mxu0 0.0
    %422 = vmatpush1.msra.mxu0 0.0
    %423 = vmatprep.subr.mxu0 0.0
    %424 = vmatpush1.msra.mxu0 0.0
    %425 = vmatprep.subr.mxu0 0.0
    %426 = vmatpush1.msra.mxu0 0.0
    %427 = vmatprep.subr.mxu0 0.0
    %428 = vmatpush1.msra.mxu0 0.0
    %429 = vmatprep.subr.mxu0 0.0
    %430 = vmatpush1.msra.mxu0 0.0
    %431 = vmatprep.subr.mxu0 0.0
    %432 = vmatpush1.msra.mxu0 0.0
    %433 = vmatprep.subr.mxu0 0.0
    %434 = vmatpush1.msra.mxu0 0.0
    %435 = vmatprep.subr.mxu0 0.0
    %436 = vmatpush1.msra.mxu0 %v316
    %437 = vmatprep.subr.mxu0 0.0
    %438 = vmatpush1.msra.mxu0 %v315
    %439 = vmatprep.subr.mxu0 0.0
    %440 = vmatpush1.msra.mxu0 %v314
    %441 = vmatprep.subr.mxu0 0.0
    %442 = vmatpush1.msra.mxu0 %v313
    %443 = vmatprep.subr.mxu0 0.0
    %444 = vmatpush1.msra.mxu0 %v312
    %445 = vmatprep.subr.mxu0 0.0
    %446 = vmatpush1.msra.mxu0 %v311
    %447 = vmatprep.subr.mxu0 0.0
    %448 = vmatpush1.msra.mxu0 %v310
    %449 = vmatprep.subr.mxu0 0.0
    %450 = vmatpush1.msra.mxu0 %v309
    %451 = vmatprep.subr.mxu0 0.0
    %452 = vmatpush2.msra.mxu0 0.0
    %453 = vmatprep.subr.mxu0 0.0
    %454 = vmatpush2.msra.mxu0 0.0
    %455 = vmatprep.subr.mxu0 0.0
    %456 = vmatpush2.msra.mxu0 0.0
    %457 = vmatprep.subr.mxu0 0.0
    %458 = vmatpush2.msra.mxu0 0.0
    %459 = vmatprep.subr.mxu0 0.0
    %460 = vmatpush2.msra.mxu0 0.0
    %461 = vmatprep.subr.mxu0 0.0
    %462 = vmatpush2.msra.mxu0 0.0
    %463 = vmatprep.subr.mxu0 0.0
    %464 = vmatpush2.msra.mxu0 0.0
    %465 = vmatprep.subr.mxu0 0.0
    %466 = vmatpush2.msra.mxu0 0.0
    %467 = vmatprep.subr.mxu0 0.0
    %468 = vmatpush2.msra.mxu0 0.0
    %469 = vmatprep.subr.mxu0 0.0
    %470 = vmatpush2.msra.mxu0 0.0
    %471 = vmatprep.subr.mxu0 0.0
    %472 = vmatpush2.msra.mxu0 0.0
    %473 = vmatprep.subr.mxu0 0.0
    %474 = vmatpush2.msra.mxu0 0.0
    %475 = vmatprep.subr.mxu0 0.0
    %476 = vmatpush2.msra.mxu0 0.0
    %477 = vmatprep.subr.mxu0 0.0
    %478 = vmatpush2.msra.mxu0 0.0
    %479 = vmatprep.subr.mxu0 0.0
    %480 = vmatpush2.msra.mxu0 0.0
    %481 = vmatprep.subr.mxu0 0.0
    %482 = vmatpush2.msra.mxu0 0.0
    %483 = vmatprep.mubr.f32.mxu0 0.0
    %484 = vmatmul.mubr.f32.gmra.mxu0 %v417
    %v485 = vpop.f32.mrf.mxu0
    %v486 = vadd.f32 0.0, %v485
    %v487 = vpop.f32.mrf.mxu0
    %488 = vdwg.mxu0
    %v489 = vmul.f32 %v486, 0.001953125
    %v490 = vld [vmem:[%s5] sm:$0x1]
    %v491 = vadd.f32 %v489, 1e-05
    %v492 = vrsqrt.pop %v491
    %v493 = vmul.f32 %v490, %v492
    %v495 = vlaneseq
    %v496 = vshrl.u32 %v495, 7
    %v497 = vsub.s32 0, %v496
    %v498 = vrot.slane %v493, %v497
    %v500 = vmul.f32 %v395, %v498
    %v501 = vmul.f32 %v396, %v498
    %v502 = vmul.f32 %v397, %v498
    %v503 = vmul.f32 %v398, %v498
    %v504 = vld [vmem:[%s6] sm:$0x1]
    %v506 = vlaneseq
    %v507 = vshrl.u32 %v506, 7
    %v508 = vsub.s32 0, %v507
    %v509 = vrot.slane %v504, %v508
    %v511 = vadd.f32 %v500, %v509
    %v512 = vadd.f32 %v501, %v509
    %v513 = vadd.f32 %v502, %v509
    %v514 = vadd.f32 %v503, %v509
    %v515 = vmax.f32 %v511, 0.0
    %v516 = vmax.f32 %v512, 0.0
    %v517 = vmax.f32 %v513, 0.0
    %v518 = vmax.f32 %v514, 0.0
    %519 = vst [vmem:[#allocation3] sm:$0xff] 0.0
    %520 = vst.msk [vmem:[#allocation3 + $0x8] sm:$0xff] %vm63, 0.0
    %521 = vst [vmem:[#allocation3 + $0x10] sm:$0xff] 0.0
    %522 = vst.msk [vmem:[#allocation3 + $0x18] sm:$0xff] %vm63, 0.0
    %523 = vst [vmem:[#allocation3 + $0x20] sm:$0xff] 0.0
    %524 = vst.msk [vmem:[#allocation3 + $0x28] sm:$0xff] %vm63, 0.0
    %525 = vst [vmem:[#allocation3 + $0x30] sm:$0xff] 0.0
    %526 = vst.msk [vmem:[#allocation3 + $0x38] sm:$0xff] %vm63, 0.0
    %v529 = vrot.slane %v515, 7
    %v530 = vrot.slane %v516, 7
    %v531 = vsel %vm77, %v529, %v530
    %534 = vst.msk [vmem:[#allocation3] sm:$0xfe] %vm83, %v529
    %535 = vst.msk [vmem:[#allocation3 + $0x10] sm:$0xff] %vm63, %v531
    %536 = vrot.lane.b32.xlu0 %v515, 64
    %v537 = vpop.permute.xlu0 %536
    %538 = vrot.lane.b32.xlu0 %v516, 64
    %v539 = vpop.permute.xlu0 %538
    %542 = vst.msk [vmem:[#allocation3] sm:$0xff] %vm92, %v537
    %543 = vst.msk [vmem:[#allocation3 + $0x10] sm:$0xff] %vm92, %v539
    %v544 = vrot.slane %v515, 1
    %v545 = vrot.slane %v516, 1
    %v546 = vsel %vm95, %v544, %v545
    %549 = vst.msk [vmem:[#allocation3 + $0x8] sm:$0xff] %vm63, %v546
    %550 = vst.msk [vmem:[#allocation3 + $0x18] sm:$0x7f] %vm102, %v545
    %v553 = vrot.slane %v517, 7
    %v554 = vrot.slane %v518, 7
    %v555 = vsel %vm77, %v553, %v554
    %558 = vst.msk [vmem:[#allocation3 + $0x20] sm:$0xfe] %vm83, %v553
    %559 = vst.msk [vmem:[#allocation3 + $0x30] sm:$0xff] %vm63, %v555
    %560 = vrot.lane.b32.xlu0 %v517, 64
    %v561 = vpop.permute.xlu0 %560
    %562 = vrot.lane.b32.xlu0 %v518, 64
    %v563 = vpop.permute.xlu0 %562
    %566 = vst.msk [vmem:[#allocation3 + $0x20] sm:$0xff] %vm92, %v561
    %567 = vst.msk [vmem:[#allocation3 + $0x30] sm:$0xff] %vm92, %v563
    %v568 = vrot.slane %v517, 1
    %v569 = vrot.slane %v518, 1
    %v570 = vsel %vm95, %v568, %v569
    %573 = vst.msk [vmem:[#allocation3 + $0x28] sm:$0xff] %vm63, %v570
    %574 = vst.msk [vmem:[#allocation3 + $0x38] sm:$0x7f] %vm102, %v569
    %v575 = vld [vmem:[#allocation3] sm:$0xff]
    %v576 = vld [vmem:[#allocation3 + $0x8] sm:$0xff]
    %v577 = vld [vmem:[#allocation3 + $0x10] sm:$0xff]
    %v578 = vld [vmem:[#allocation3 + $0x18] sm:$0xff]
    %v579 = vld [vmem:[#allocation3 + $0x20] sm:$0xff]
    %v580 = vld [vmem:[#allocation3 + $0x28] sm:$0xff]
    %v581 = vld [vmem:[#allocation3 + $0x30] sm:$0xff]
    %v582 = vld [vmem:[#allocation3 + $0x38] sm:$0xff]
    %v583 = vpack.c.bf16 %v577, %v575
    %v584 = vpack.c.bf16 %v578, %v576
    %v585 = vpack.c.bf16 %v581, %v579
    %v586 = vpack.c.bf16 %v582, %v580
    %v587 = vld [vmem:[#allocation4] sm:$0xf]
    %v588 = vld [vmem:[#allocation4 + $0x4] sm:$0xf]
    %v589 = vld [vmem:[#allocation4 + $0x8] sm:$0xf]
    %v590 = vld [vmem:[#allocation4 + $0xc] sm:$0xf]
    %v591 = vld [vmem:[#allocation4 + $0x10] sm:$0xf]
    %v592 = vld [vmem:[#allocation4 + $0x14] sm:$0xf]
    %v593 = vld [vmem:[#allocation4 + $0x18] sm:$0xf]
    %v594 = vld [vmem:[#allocation4 + $0x1c] sm:$0xf]
    %v595 = vld [vmem:[#allocation4 + $0x20] sm:$0xf]
    %v596 = vld [vmem:[#allocation4 + $0x24] sm:$0xf]
    %v597 = vld [vmem:[#allocation4 + $0x28] sm:$0xf]
    %v598 = vld [vmem:[#allocation4 + $0x2c] sm:$0xf]
    %v599 = vld [vmem:[#allocation4 + $0x30] sm:$0xf]
    %v600 = vld [vmem:[#allocation4 + $0x34] sm:$0xf]
    %v601 = vld [vmem:[#allocation4 + $0x38] sm:$0xf]
    %v602 = vld [vmem:[#allocation4 + $0x3c] sm:$0xf]
    %v603 = vld [vmem:[#allocation4 + $0x40] sm:$0xf]
    %v604 = vld [vmem:[#allocation4 + $0x44] sm:$0xf]
    %v605 = vld [vmem:[#allocation4 + $0x48] sm:$0xf]
    %v606 = vld [vmem:[#allocation4 + $0x4c] sm:$0xf]
    %v607 = vld [vmem:[#allocation4 + $0x50] sm:$0xf]
    %v608 = vld [vmem:[#allocation4 + $0x54] sm:$0xf]
    %v609 = vld [vmem:[#allocation4 + $0x58] sm:$0xf]
    %v610 = vld [vmem:[#allocation4 + $0x5c] sm:$0xf]
    %v635 = vunpack.c.l.b16 %v587
    %v636 = vunpack.c.l.b16 %v588
    %v637 = vunpack.c.l.b16 %v589
    %v638 = vunpack.c.l.b16 %v590
    %v639 = vunpack.c.l.b16 %v591
    %v640 = vunpack.c.l.b16 %v592
    %v641 = vunpack.c.l.b16 %v593
    %v642 = vunpack.c.l.b16 %v594
    %v643 = vunpack.c.l.b16 %v595
    %v644 = vunpack.c.l.b16 %v596
    %v645 = vunpack.c.l.b16 %v597
    %v646 = vunpack.c.l.b16 %v598
    %v647 = vunpack.c.l.b16 %v599
    %v648 = vunpack.c.l.b16 %v600
    %v649 = vunpack.c.l.b16 %v601
    %v650 = vunpack.c.l.b16 %v602
    %v651 = vunpack.c.l.b16 %v603
    %v652 = vunpack.c.l.b16 %v604
    %v653 = vunpack.c.l.b16 %v605
    %v654 = vunpack.c.l.b16 %v606
    %v655 = vunpack.c.l.b16 %v607
    %v656 = vunpack.c.l.b16 %v608
    %v657 = vunpack.c.l.b16 %v609
    %v658 = vunpack.c.l.b16 %v610
    %v659 = vpack.c.b16 %v636, %v635
    %v660 = vpack.c.b16 %v638, %v637
    %v661 = vpack.c.b16 %v640, %v639
    %v662 = vpack.c.b16 %v642, %v641
    %v663 = vpack.c.b16 %v644, %v643
    %v664 = vpack.c.b16 %v646, %v645
    %v665 = vpack.c.b16 %v648, %v647
    %v666 = vpack.c.b16 %v650, %v649
    %v667 = vpack.c.b16 %v652, %v651
    %v668 = vpack.c.b16 %v654, %v653
    %v669 = vpack.c.b16 %v656, %v655
    %v670 = vpack.c.b16 %v658, %v657
    %v684 = vsel %vm63, %v584, 0
    %v687 = vsel %vm63, %v586, 0
    %689 = vmatprep.subr.bf16.mxu0 0
    %690 = vmatpush1.bf16.msra.mxu0 %v666
    %691 = vmatprep.subr.bf16.mxu0 0
    %692 = vmatpush1.bf16.msra.mxu0 %v665
    %693 = vmatprep.subr.bf16.mxu0 0
    %694 = vmatpush1.bf16.msra.mxu0 %v664
    %695 = vmatprep.subr.bf16.mxu0 0
    %696 = vmatpush1.bf16.msra.mxu0 %v663
    %697 = vmatprep.subr.bf16.mxu0 0
    %698 = vmatpush1.bf16.msra.mxu0 %v662
    %699 = vmatprep.subr.bf16.mxu0 0
    %700 = vmatpush1.bf16.msra.mxu0 %v661
    %701 = vmatprep.subr.bf16.mxu0 0
    %702 = vmatpush1.bf16.msra.mxu0 %v660
    %703 = vmatprep.subr.bf16.mxu0 0
    %704 = vmatpush1.bf16.msra.mxu0 %v659
    %705 = vmatprep.subr.bf16.mxu0 0
    %706 = vmatpush2.bf16.msra.mxu0 0
    %707 = vmatprep.subr.bf16.mxu0 0
    %708 = vmatpush2.bf16.msra.mxu0 0
    %709 = vmatprep.subr.bf16.mxu0 0
    %710 = vmatpush2.bf16.msra.mxu0 0
    %711 = vmatprep.subr.bf16.mxu0 0
    %712 = vmatpush2.bf16.msra.mxu0 0
    %713 = vmatprep.subr.bf16.mxu0 0
    %714 = vmatpush2.bf16.msra.mxu0 %v670
    %715 = vmatprep.subr.bf16.mxu0 0
    %716 = vmatpush2.bf16.msra.mxu0 %v669
    %717 = vmatprep.subr.bf16.mxu0 0
    %718 = vmatpush2.bf16.msra.mxu0 %v668
    %719 = vmatprep.subr.bf16.mxu0 0
    %720 = vmatpush2.bf16.msra.mxu0 %v667
    %721 = vmatprep.mubr.bf16.mxu0 %v684
    %722 = vmatmul.mubr.bf16.gmra.mxu0 %v583
    %v723 = vpop.f32.mrf.mxu0
    %v724 = vadd.f32 0.0, %v723
    %v725 = vpop.f32.mrf.mxu0
    %v726 = vpop.f32.mrf.mxu0
    %v727 = vadd.f32 0.0, %v726
    %v728 = vpop.f32.mrf.mxu0
    %729 = vmatprep.mubr.bf16.mxu0 %v687
    %730 = vmatmul.mubr.bf16.gmra.mxu0 %v585
    %v731 = vpop.f32.mrf.mxu0
    %v732 = vadd.f32 0.0, %v731
    %v733 = vpop.f32.mrf.mxu0
    %v734 = vpop.f32.mrf.mxu0
    %v735 = vadd.f32 0.0, %v734
    %v736 = vpop.f32.mrf.mxu0
    %737 = vdwg.mxu0
    %v738 = vadd.f32 %v724, %v727
    %v739 = vadd.f32 %v738, %v732
    %v740 = vadd.f32 %v739, %v735
    %v741 = vrot.slane %v740, 4
    %v742 = vadd.f32 %v740, %v741
    %v743 = vrot.slane %v742, 2
    %v744 = vadd.f32 %v742, %v743
    %v745 = vrot.slane %v744, 1
    %v746 = vadd.f32 %v744, %v745
    %v747 = vld [vmem:[%s4] sm:$0xff]
    %v748 = vld [vmem:[%s4 + $0x8] sm:$0xff]
    %v749 = vld [vmem:[%s4 + $0x10] sm:$0xff]
    %v750 = vld [vmem:[%s4 + $0x18] sm:$0xff]
    %v751 = vld [vmem:[%s4 + $0x20] sm:$0xff]
    %v752 = vld [vmem:[%s4 + $0x28] sm:$0xff]
    %v753 = vld [vmem:[%s4 + $0x30] sm:$0xff]
    %v754 = vld [vmem:[%s4 + $0x38] sm:$0xff]
    %v755 = vld [vmem:[%s4 + $0x40] sm:$0xff]
    %v756 = vld [vmem:[%s4 + $0x48] sm:$0xff]
    %v757 = vld [vmem:[%s4 + $0x50] sm:$0xff]
    %v758 = vld [vmem:[%s4 + $0x58] sm:$0xff]
    %v759 = vld [vmem:[%s4 + $0x60] sm:$0xff]
    %v760 = vld [vmem:[%s4 + $0x68] sm:$0xff]
    %v761 = vld [vmem:[%s4 + $0x70] sm:$0xff]
    %v762 = vld [vmem:[%s4 + $0x78] sm:$0xff]
    %763 = vmatprep.subr.mxu0 0.0
    %764 = vmatpush1.msra.mxu0 %v762
    %765 = vmatprep.subr.mxu0 0.0
    %766 = vmatpush1.msra.mxu0 %v761
    %767 = vmatprep.subr.mxu0 0.0
    %768 = vmatpush1.msra.mxu0 %v760
    %769 = vmatprep.subr.mxu0 0.0
    %770 = vmatpush1.msra.mxu0 %v759
    %771 = vmatprep.subr.mxu0 0.0
    %772 = vmatpush1.msra.mxu0 %v758
    %773 = vmatprep.subr.mxu0 0.0
    %774 = vmatpush1.msra.mxu0 %v757
    %775 = vmatprep.subr.mxu0 0.0
    %776 = vmatpush1.msra.mxu0 %v756
    %777 = vmatprep.subr.mxu0 0.0
    %778 = vmatpush1.msra.mxu0 %v755
    %779 = vmatprep.subr.mxu0 0.0
    %780 = vmatpush1.msra.mxu0 %v754
    %781 = vmatprep.subr.mxu0 0.0
    %782 = vmatpush1.msra.mxu0 %v753
    %783 = vmatprep.subr.mxu0 0.0
    %784 = vmatpush1.msra.mxu0 %v752
    %785 = vmatprep.subr.mxu0 0.0
    %786 = vmatpush1.msra.mxu0 %v751
    %787 = vmatprep.subr.mxu0 0.0
    %788 = vmatpush1.msra.mxu0 %v750
    %789 = vmatprep.subr.mxu0 0.0
    %790 = vmatpush1.msra.mxu0 %v749
    %791 = vmatprep.subr.mxu0 0.0
    %792 = vmatpush1.msra.mxu0 %v748
    %793 = vmatprep.subr.mxu0 0.0
    %794 = vmatpush1.msra.mxu0 %v747
    %795 = vmatprep.subr.mxu0 0.0
    %796 = vmatpush2.msra.mxu0 0.0
    %797 = vmatprep.subr.mxu0 0.0
    %798 = vmatpush2.msra.mxu0 0.0
    %799 = vmatprep.subr.mxu0 0.0
    %800 = vmatpush2.msra.mxu0 0.0
    %801 = vmatprep.subr.mxu0 0.0
    %802 = vmatpush2.msra.mxu0 0.0
    %803 = vmatprep.subr.mxu0 0.0
    %804 = vmatpush2.msra.mxu0 0.0
    %805 = vmatprep.subr.mxu0 0.0
    %806 = vmatpush2.msra.mxu0 0.0
    %807 = vmatprep.subr.mxu0 0.0
    %808 = vmatpush2.msra.mxu0 0.0
    %809 = vmatprep.subr.mxu0 0.0
    %810 = vmatpush2.msra.mxu0 0.0
    %811 = vmatprep.subr.mxu0 0.0
    %812 = vmatpush2.msra.mxu0 0.0
    %813 = vmatprep.subr.mxu0 0.0
    %814 = vmatpush2.msra.mxu0 0.0
    %815 = vmatprep.subr.mxu0 0.0
    %816 = vmatpush2.msra.mxu0 0.0
    %817 = vmatprep.subr.mxu0 0.0
    %818 = vmatpush2.msra.mxu0 0.0
    %819 = vmatprep.subr.mxu0 0.0
    %820 = vmatpush2.msra.mxu0 0.0
    %821 = vmatprep.subr.mxu0 0.0
    %822 = vmatpush2.msra.mxu0 0.0
    %823 = vmatprep.subr.mxu0 0.0
    %824 = vmatpush2.msra.mxu0 0.0
    %825 = vmatprep.subr.mxu0 0.0
    %826 = vmatpush2.msra.mxu0 0.0
    %827 = vmatprep.mubr.f32.mxu0 0.0
    %828 = vmatmul.mubr.f32.gmra.mxu0 %v746
    %v829 = vpop.f32.mrf.mxu0
    %v830 = vadd.f32 0.0, %v829
    %v831 = vpop.f32.mrf.mxu0
    %832 = vdwg.mxu0
    %v833 = vmul.f32 %v830, 0.001953125
    %v834 = vlaneseq
    %v835 = vshrl.u32 %v834, 7
    %v836 = vsub.s32 0, %v835
    %v837 = vrot.slane %v833, %v836
    %v838 = vsub.f32 %v724, %v837
    %v839 = vsub.f32 %v727, %v837
    %v840 = vsub.f32 %v732, %v837
    %v841 = vsub.f32 %v735, %v837
    %v842 = vmul.f32 %v838, %v838
    %v843 = vmul.f32 %v839, %v839
    %v844 = vmul.f32 %v840, %v840
    %v845 = vmul.f32 %v841, %v841
    %v846 = vadd.f32 %v842, %v843
    %v847 = vadd.f32 %v846, %v844
    %v848 = vadd.f32 %v847, %v845
    %v849 = vrot.slane %v848, 4
    %v850 = vadd.f32 %v848, %v849
    %v851 = vrot.slane %v850, 2
    %v852 = vadd.f32 %v850, %v851
    %v853 = vrot.slane %v852, 1
    %v854 = vadd.f32 %v852, %v853
    %855 = vmatprep.subr.mxu0 0.0
    %856 = vmatpush1.msra.mxu0 %v762
    %857 = vmatprep.subr.mxu0 0.0
    %858 = vmatpush1.msra.mxu0 %v761
    %859 = vmatprep.subr.mxu0 0.0
    %860 = vmatpush1.msra.mxu0 %v760
    %861 = vmatprep.subr.mxu0 0.0
    %862 = vmatpush1.msra.mxu0 %v759
    %863 = vmatprep.subr.mxu0 0.0
    %864 = vmatpush1.msra.mxu0 %v758
    %865 = vmatprep.subr.mxu0 0.0
    %866 = vmatpush1.msra.mxu0 %v757
    %867 = vmatprep.subr.mxu0 0.0
    %868 = vmatpush1.msra.mxu0 %v756
    %869 = vmatprep.subr.mxu0 0.0
    %870 = vmatpush1.msra.mxu0 %v755
    %871 = vmatprep.subr.mxu0 0.0
    %872 = vmatpush1.msra.mxu0 %v754
    %873 = vmatprep.subr.mxu0 0.0
    %874 = vmatpush1.msra.mxu0 %v753
    %875 = vmatprep.subr.mxu0 0.0
    %876 = vmatpush1.msra.mxu0 %v752
    %877 = vmatprep.subr.mxu0 0.0
    %878 = vmatpush1.msra.mxu0 %v751
    %879 = vmatprep.subr.mxu0 0.0
    %880 = vmatpush1.msra.mxu0 %v750
    %881 = vmatprep.subr.mxu0 0.0
    %882 = vmatpush1.msra.mxu0 %v749
    %883 = vmatprep.subr.mxu0 0.0
    %884 = vmatpush1.msra.mxu0 %v748
    %885 = vmatprep.subr.mxu0 0.0
    %886 = vmatpush1.msra.mxu0 %v747
    %887 = vmatprep.subr.mxu0 0.0
    %888 = vmatpush2.msra.mxu0 0.0
    %889 = vmatprep.subr.mxu0 0.0
    %890 = vmatpush2.msra.mxu0 0.0
    %891 = vmatprep.subr.mxu0 0.0
    %892 = vmatpush2.msra.mxu0 0.0
    %893 = vmatprep.subr.mxu0 0.0
    %894 = vmatpush2.msra.mxu0 0.0
    %895 = vmatprep.subr.mxu0 0.0
    %896 = vmatpush2.msra.mxu0 0.0
    %897 = vmatprep.subr.mxu0 0.0
    %898 = vmatpush2.msra.mxu0 0.0
    %899 = vmatprep.subr.mxu0 0.0
    %900 = vmatpush2.msra.mxu0 0.0
    %901 = vmatprep.subr.mxu0 0.0
    %902 = vmatpush2.msra.mxu0 0.0
    %903 = vmatprep.subr.mxu0 0.0
    %904 = vmatpush2.msra.mxu0 0.0
    %905 = vmatprep.subr.mxu0 0.0
    %906 = vmatpush2.msra.mxu0 0.0
    %907 = vmatprep.subr.mxu0 0.0
    %908 = vmatpush2.msra.mxu0 0.0
    %909 = vmatprep.subr.mxu0 0.0
    %910 = vmatpush2.msra.mxu0 0.0
    %911 = vmatprep.subr.mxu0 0.0
    %912 = vmatpush2.msra.mxu0 0.0
    %913 = vmatprep.subr.mxu0 0.0
    %914 = vmatpush2.msra.mxu0 0.0
    %915 = vmatprep.subr.mxu0 0.0
    %916 = vmatpush2.msra.mxu0 0.0
    %917 = vmatprep.subr.mxu0 0.0
    %918 = vmatpush2.msra.mxu0 0.0
    %919 = vmatprep.mubr.f32.mxu0 0.0
    %920 = vmatmul.mubr.f32.gmra.mxu0 %v854
    %v921 = vpop.f32.mrf.mxu0
    %v922 = vadd.f32 0.0, %v921
    %v923 = vpop.f32.mrf.mxu0
    %924 = vdwg.mxu0
    %v925 = vmul.f32 %v922, 0.001953125
    %v926 = vld [vmem:[%s7] sm:$0x1]
    %v927 = vadd.f32 %v925, 1e-05
    %v928 = vrsqrt.pop %v927
    %v929 = vmul.f32 %v926, %v928
    %v931 = vlaneseq
    %v932 = vshrl.u32 %v931, 7
    %v933 = vsub.s32 0, %v932
    %v934 = vrot.slane %v929, %v933
    %v936 = vmul.f32 %v838, %v934
    %v937 = vmul.f32 %v839, %v934
    %v938 = vmul.f32 %v840, %v934
    %v939 = vmul.f32 %v841, %v934
    %v940 = vld [vmem:[%s8] sm:$0x1]
    %v942 = vlaneseq
    %v943 = vshrl.u32 %v942, 7
    %v944 = vsub.s32 0, %v943
    %v945 = vrot.slane %v940, %v944
    %v947 = vadd.f32 %v936, %v945
    %v948 = vadd.f32 %v937, %v945
    %v949 = vadd.f32 %v938, %v945
    %v950 = vadd.f32 %v939, %v945
    %951 = vst [vmem:[#allocation9] sm:$0xff] %v947
    %952 = vst [vmem:[#allocation9 + $0x8] sm:$0xff] %v948
    %953 = vst [vmem:[#allocation9 + $0x10] sm:$0xff] %v949
    %954 = vst [vmem:[#allocation9 + $0x18] sm:$0xff] %v950
    // Predicated region
    $region46: #{tpu_custom_call.1} parent=1 // pred_check
      _
    $region47: #{tpu_custom_call.1} parent=1 // pred_check_branch
      %956 = sbr.rel (0) target = $region49
    $region48: #{tpu_custom_call.1} parent=1 // pred_region
      %s958 = ssub.s32 512, 512
      %959 = vsyncadd [#allocation6], %s958
      %s960 = sshll.u32 [#allocation9], 4
      %s961 = int_to_ptr.vmem [resolvable:$true] %s960
      %966 = dma.vmem_to_hbm [thread:$0]  %s961, 512, %s9, [#allocation6], 128, 128, 8
    $region49: #{tpu_custom_call.1} parent=1 // pred_fallthru
      _
    // Predicated region
    $region50: #{tpu_custom_call.1} parent=1 // pred_check
      _
    $region51: #{tpu_custom_call.1} parent=1 // pred_check_branch
      %968 = sbr.rel (0) target = $region53
    $region52: #{tpu_custom_call.1} parent=1 // pred_region
      %969 = dma.done [#allocation6], 512
    $region53: #{tpu_custom_call.1} parent=1 // pred_fallthru
      _
    %970 = vsyncpa [#allocation5], 1
    %971 = vsyncpa [#allocation8], 1
    %972 = vsyncpa [#allocation6], 1

</llo_original>
